<compile_context>
chip_gen: v7x
topology: tpu7x:2x2x1
jax: 0.10.0
libtpu: 0.0.40
codegen_flags: <defaults>
</compile_context>

<pallas_src>
import functools

import jax
import jax.numpy as jnp
import numpy as np
from jax.experimental import pallas as pl
from jax.experimental.pallas import tpu as pltpu

NEG_PAD = -1e30  # bias for padded class columns -> exp() underflows to exactly 0


def _round_up(x, m):
    return (x + m - 1) // m * m


def _vmem_limit_bytes():
    """Per-generation VMEM request: ~100 MiB on 128 MiB parts, ~48 MiB on v7x."""
    cap = 64 << 20
    try:
        info = pltpu.get_tpu_info()
        cap = int(getattr(info, "vmem_capacity_bytes", cap))
    except Exception:
        pass
    return int(min(max(cap - (16 << 20), 32 << 20), 100 << 20))


# -----------------------------------------------------------------------------
# Kernel 1: feature transform   S = dinv[:, None] * (X @ W)
#   Row-tiled over nodes; the contraction dim (F or 2F, padded) is kept whole.
#   TODO(synk): add a K-reduction grid axis here for very large feature dims.
# -----------------------------------------------------------------------------
def _transform_kernel(x_ref, w_ref, dinv_ref, s_ref):
    x = x_ref[...].astype(jnp.float32)          # h1 arrives in bf16 for layer 2
    t = jnp.dot(x, w_ref[...], preferred_element_type=jnp.float32)
    s_ref[...] = (dinv_ref[...] * t).astype(s_ref.dtype)


def _transform(x, w, dinv, tile_n, vmem_limit):
    n_pad, f_in = x.shape
    h_out = w.shape[1]
    return pl.pallas_call(
        _transform_kernel,
        out_shape=jax.ShapeDtypeStruct((n_pad, h_out), jnp.bfloat16),
        grid=(n_pad // tile_n,),
        in_specs=[
            pl.BlockSpec((tile_n, f_in), lambda i: (i, 0)),   # X row block
            pl.BlockSpec((f_in, h_out), lambda i: (0, 0)),    # W (whole)
            pl.BlockSpec((tile_n, 1), lambda i: (i, 0)),      # dinv rows
        ],
        out_specs=pl.BlockSpec((tile_n, h_out), lambda i: (i, 0)),
        compiler_params=pltpu.CompilerParams(
            dimension_semantics=("parallel",),
            vmem_limit_bytes=vmem_limit),
    )(x, w, dinv)


# -----------------------------------------------------------------------------
# Kernel 2: normalized aggregation + fused epilogue
#   Z = dinv[:, None] * (A_hat @ S) + b   (K-reduction over node tiles)
#   epilogue = "prelu" (hidden layer)  or  "log_softmax" (final layer)
#   A_hat block arrives as int8 and is upcast to bf16 under the DMA (VPU filler).
# -----------------------------------------------------------------------------
def _aggregate_kernel(a_ref, s_ref, dinv_ref, b_ref, alpha_ref,
                      out_ref, acc_ref, *, epilogue, s_resident, tile_k):
    k = pl.program_id(1)

    @pl.when(k == 0)
    def _():
        acc_ref[...] = jnp.zeros_like(acc_ref)

    a = a_ref[...].astype(jnp.bfloat16)              # 0/1 entries: exact upcast
    if s_resident:
        base = pl.multiple_of(k * tile_k, tile_k)    # aligned slice of resident S
        s = s_ref[pl.ds(base, tile_k), :]
    else:
        s = s_ref[...]
    # bf16 x bf16 -> f32 accumulate on the MXU.
    acc_ref[...] += jnp.dot(a, s, preferred_element_type=jnp.float32)

    @pl.when(k == pl.num_programs(1) - 1)
    def _():
        z = dinv_ref[...] * acc_ref[...] + b_ref[...]
        if epilogue == "prelu":
            alpha = alpha_ref[0]                     # scalar read from SMEM
            z = jnp.where(z >= 0.0, z, alpha * z)
            # TODO(synk): nn.Dropout(0.1) omitted — inference/eval mode (identity).
        else:  # "log_softmax" over classes; padded columns carry bias = NEG_PAD
            m = jnp.max(z, axis=1, keepdims=True)
            z = z - (m + jnp.log(jnp.sum(jnp.exp(z - m), axis=1, keepdims=True)))
        out_ref[...] = z.astype(out_ref.dtype)


def _aggregate(a_i8, s, dinv, bias, alpha, tile_i, tile_k, vmem_limit,
               epilogue, out_dtype, s_resident):
    n_pad = a_i8.shape[0]
    h_out = s.shape[1]
    if s_resident:
        # Full S resident in VMEM; fetched once (constant block index).
        s_spec = pl.BlockSpec((n_pad, h_out), lambda i, k: (0, 0))
    else:
        s_spec = pl.BlockSpec((tile_k, h_out), lambda i, k: (k, 0))
    kern = functools.partial(_aggregate_kernel, epilogue=epilogue,
                             s_resident=s_resident, tile_k=tile_k)
    return pl.pallas_call(
        kern,
        out_shape=jax.ShapeDtypeStruct((n_pad, h_out), out_dtype),
        grid=(n_pad // tile_i, n_pad // tile_k),
        in_specs=[
            pl.BlockSpec((tile_i, tile_k), lambda i, k: (i, k)),    # A_hat (int8)
            s_spec,                                                 # S
            pl.BlockSpec((tile_i, 1), lambda i, k: (i, 0)),         # dinv rows
            pl.BlockSpec((1, h_out), lambda i, k: (0, 0)),          # bias
            pl.BlockSpec(memory_space=pltpu.MemorySpace.SMEM),      # PReLU alpha
        ],
        out_specs=pl.BlockSpec((tile_i, h_out), lambda i, k: (i, 0)),
        scratch_shapes=[pltpu.VMEM((tile_i, h_out), jnp.float32)],
        compiler_params=pltpu.CompilerParams(
            dimension_semantics=("parallel", "arbitrary"),
            vmem_limit_bytes=vmem_limit),
    )(a_i8, s, dinv, bias, alpha)


# -----------------------------------------------------------------------------
# Wrapper: full GCN_Net forward (inference)
# -----------------------------------------------------------------------------
def gcn_net_forward(A, x, w1, b1, w2, b2, alpha):
    """2-layer GCN_Net forward.

    A  : (N, N) dense adjacency, entries binarized (matching
         edge_index = torch.where(A)).  Assumed symmetric (undirected graph),
         so A_hat^T == A_hat and no transpose is needed.
    x  : (N, F) features.   w1: (F, 2F), b1: (2F,).   w2: (2F, C), b2: (C,).
    alpha: PReLU slope (scalar).
    Returns (N, C) log-probabilities.
    """
    N, F = x.shape
    H = w1.shape[1]
    C = w2.shape[1]

    # ---- tiling: never fall back to a 128 K-tile; keep >= 2 row tiles -------
    pad_unit = 1024 if N >= 2048 else 512
    n_pad = _round_up(max(N, 512), pad_unit)
    tile_k = pad_unit           # 512 or 1024, always divides n_pad
    tile_i = 256                # even row-tile count -> both v7x TensorCores busy
    h_pad = _round_up(H, 128)
    c_pad = _round_up(C, 128)

    vmem_limit = _vmem_limit_bytes()
    # Keep S resident across the K-reduction when it comfortably fits VMEM
    # (account for double-buffering + A blocks + accumulator headroom).
    def s_fits(h_out):
        return 2 * n_pad * h_out * 2 <= vmem_limit // 3

    # ---- graph preprocessing (wrapper-side, one-time O(N^2)) ---------------
    # GCNConv defaults: add (remaining) self loops, symmetric normalization,
    # deg_i = per-target (column) degree of A_hat.
    a_hat = jnp.maximum((A != 0.0).astype(jnp.float32),
                        jnp.eye(N, dtype=jnp.float32))
    deg = jnp.sum(a_hat, axis=0)
    dinv = jnp.where(deg > 0.0, jax.lax.rsqrt(deg), 0.0)

    # A_hat stored in int8 (0/1 exact); upcast to bf16 happens inside the kernel.
    a_pad = jnp.zeros((n_pad, n_pad), jnp.int8)
    a_pad = a_pad.at[:N, :N].set(a_hat.astype(jnp.int8))
    x_pad = jnp.zeros((n_pad, F), jnp.float32).at[:N].set(x.astype(jnp.float32))
    dinv_pad = jnp.zeros((n_pad, 1), jnp.float32).at[:N, 0].set(dinv)

    w1_p = jnp.zeros((F, h_pad), jnp.float32).at[:, :H].set(w1)
    b1_p = jnp.zeros((1, h_pad), jnp.float32).at[0, :H].set(jnp.reshape(b1, (H,)))
    w2_p = jnp.zeros((h_pad, c_pad), jnp.float32).at[:H, :C].set(w2)
    b2_p = jnp.full((1, c_pad), NEG_PAD, jnp.float32).at[0, :C].set(
        jnp.reshape(b2, (C,)))
    alpha_s = jnp.reshape(jnp.asarray(alpha, jnp.float32), (1,))

    # ---- layer 1: GCNConv(F -> 2F) + PReLU (+ dropout = identity) ----------
    s1 = _transform(x_pad, w1_p, dinv_pad, tile_i, vmem_limit)
    h1 = _aggregate(a_pad, s1, dinv_pad, b1_p, alpha_s, tile_i, tile_k,
                    vmem_limit, epilogue="prelu", out_dtype=jnp.bfloat16,
                    s_resident=s_fits(h_pad))

    # ---- layer 2: GCNConv(2F -> C) + log_softmax ---------------------------
    s2 = _transform(h1, w2_p, dinv_pad, tile_i, vmem_limit)
    out_pad = _aggregate(a_pad, s2, dinv_pad, b2_p, alpha_s, tile_i, tile_k,
                         vmem_limit, epilogue="log_softmax",
                         out_dtype=jnp.float32, s_resident=s_fits(c_pad))

    return out_pad[:N, :C]


# -----------------------------------------------------------------------------
if __name__ == "__main__":
    key = jax.random.PRNGKey(0)
    k_a, k_x, k_w1, k_w2 = jax.random.split(key, 4)

    # Small, module-consistent shapes.
    N = 64            # number of graph nodes
    F = 16            # num_feat
    n_classes = 4     # len(np.unique(Ys))
    H = 2 * F         # hidden width of first GCN layer

    # Random symmetric binary adjacency (no self loops) + features.
    a_rand = jax.random.uniform(k_a, (N, N))
    A = (a_rand < 0.1).astype(jnp.float32)
    A = jnp.maximum(A, A.T)
    A = A * (1.0 - jnp.eye(N, dtype=jnp.float32))

    x = jax.random.normal(k_x, (N, F), jnp.float32)

    def glorot(k, shape):
        # PyG glorot init: U(-a, a), a = sqrt(6 / (fan_in + fan_out))
        a = float(np.sqrt(6.0 / (shape[0] + shape[1])))
        return jax.random.uniform(k, shape, jnp.float32, minval=-a, maxval=a)

    W1 = glorot(k_w1, (F, H))
    b1 = jnp.zeros((H,), jnp.float32)
    W2 = glorot(k_w2, (H, n_classes))
    b2 = jnp.zeros((n_classes,), jnp.float32)
    alpha = jnp.float32(0.25)     # nn.PReLU default

    out = jax.block_until_ready(gcn_net_forward(A, x, W1, b1, W2, b2, alpha))

    # Pure-JAX f32 reference (exact GCNConv semantics, eval mode).
    a_hat = jnp.maximum(A, jnp.eye(N, dtype=jnp.float32))
    deg = jnp.sum(a_hat, axis=0)
    dinv = jnp.where(deg > 0.0, 1.0 / jnp.sqrt(deg), 0.0)
    agg = dinv[:, None] * a_hat.T * dinv[None, :]
    h = agg @ (x @ W1) + b1[None, :]
    h = jnp.where(h >= 0.0, h, 0.25 * h)
    z = agg @ (h @ W2) + b2[None, :]
    ref = jax.nn.log_softmax(z, axis=1)

    assert out.shape == (N, n_classes)
    assert bool(jnp.all(jnp.isfinite(out)))
    row_sums = jnp.sum(jnp.exp(out), axis=1)
    assert bool(jnp.all(jnp.abs(row_sums - 1.0) < 1e-4))
    max_err = float(jnp.max(jnp.abs(out - ref)))
    assert max_err < 0.1, f"max |out - ref| = {max_err}"   # bf16 S/h1 tolerance

    print("KERNEL_OK")
</pallas_src>

<mosaic_0001>
module attributes {stable_mosaic.version = 11 : i64} {
  func.func @_transform_kernel(%arg0: i32, %arg1: memref<256x16xf32, #tpu.memory_space<vmem>>, %arg2: memref<16x128xf32, #tpu.memory_space<vmem>>, %arg3: memref<256x1xf32, #tpu.memory_space<vmem>>, %arg4: memref<256x128xbf16, #tpu.memory_space<vmem>>) attributes {dimension_semantics = [#tpu.dimension_semantics<parallel>], iteration_bounds = array<i64: 2>, scalar_prefetch = 0 : i64, scratch_operands = 0 : i64, tpu.core_type = #tpu.core_type<tc>, window_params = [{transform_indices = @transform_0, window_bounds = array<i64: 256, 16>}, {pipeline_mode = #tpu.pipeline_mode<synchronous>, transform_indices = @transform_1, window_bounds = array<i64: 16, 128>}, {transform_indices = @transform_2, window_bounds = array<i64: 256, 1>}, {transform_indices = @transform_3, window_bounds = array<i64: 256, 128>}]} {
    %c0 = arith.constant 0 : index
    %c0_0 = arith.constant 0 : index
    %0 = vector.load %arg1[%c0, %c0_0] : memref<256x16xf32, #tpu.memory_space<vmem>>, vector<256x16xf32>
    %c0_1 = arith.constant 0 : index
    %c0_2 = arith.constant 0 : index
    %1 = vector.load %arg2[%c0_1, %c0_2] : memref<16x128xf32, #tpu.memory_space<vmem>>, vector<16x128xf32>
    %cst = arith.constant dense<0.000000e+00> : vector<256x128xf32>
    %2 = tpu.matmul %0, %1, %cst {dimension_numbers = #tpu.dot_dimension_numbers<[1], [0], [0], [1], [0, 0, 1, 1], [], []>} : vector<256x16xf32>, vector<16x128xf32>, vector<256x128xf32> -> vector<256x128xf32>
    %c0_3 = arith.constant 0 : index
    %c0_4 = arith.constant 0 : index
    %3 = vector.load %arg3[%c0_3, %c0_4] : memref<256x1xf32, #tpu.memory_space<vmem>>, vector<256x1xf32>
    %4 = vector.broadcast %3 : vector<256x1xf32> to vector<256x128xf32>
    %5 = arith.mulf %4, %2 : vector<256x128xf32>
    %6 = arith.truncf %5 : vector<256x128xf32> to vector<256x128xbf16>
    %c0_5 = arith.constant 0 : index
    %c0_6 = arith.constant 0 : index
    %7 = vector.load %arg4[%c0_5, %c0_6] : memref<256x128xbf16, #tpu.memory_space<vmem>>, vector<256x128xbf16>
    tpu.vector_store %arg4[%c0_5, %c0_6], %6 {strides = array<i32>} : memref<256x128xbf16, #tpu.memory_space<vmem>>, vector<256x128xbf16>,
    return
  }
  func.func @transform_0(%arg0: i32) -> (i32, i32) {
    %c0_i32 = arith.constant 0 : i32
    %c0_i32_0 = arith.constant 0 : i32
    return %arg0, %c0_i32 : i32, i32
  }
  func.func @transform_1(%arg0: i32) -> (i32, i32) {
    %c0_i32 = arith.constant 0 : i32
    %c0_i32_0 = arith.constant 0 : i32
    %c0_i32_1 = arith.constant 0 : i32
    return %c0_i32, %c0_i32_0 : i32, i32
  }
  func.func @transform_2(%arg0: i32) -> (i32, i32) {
    %c0_i32 = arith.constant 0 : i32
    %c0_i32_0 = arith.constant 0 : i32
    return %arg0, %c0_i32 : i32, i32
  }
  func.func @transform_3(%arg0: i32) -> (i32, i32) {
    %c0_i32 = arith.constant 0 : i32
    %c0_i32_0 = arith.constant 0 : i32
    return %arg0, %c0_i32 : i32, i32
  }
}

</mosaic_0001>

<llo_original>
// kernel: tpu_custom_call.1
$region0: #{tpu_custom_call.1}
  #allocation0 [shape = 'u32[]', space=smem, size = 0x4, offset = 0x4, fixed_abs, tag = 'smem constant byte address 0x4 - core index']
  #allocation1 [shape = 'u32[144,128]{1,0:T(1,128)}', space=vmem, size = 0x12000, scoped, tag = 'internal scratch']
  %s0 = inlined_call_operand.vmem [shape: f32[512,16], index: 0, kind: input, shape index: {}]
  %s1 = inlined_call_operand.vmem [shape: f32[16,128], index: 1, kind: input, shape index: {}]
  %s2 = inlined_call_operand.vmem [shape: f32[512,1], index: 2, kind: input, shape index: {}]
  %s3 = inlined_call_operand.hbm [shape: bf16[512,128], index: 3, kind: output, shape index: {}]
  %s4 = sld [smem:[#allocation0]]
  $region45: #{tpu_custom_call.1} parent=0
    _
  %s6 = ssub.s32 1, %s4
  %s7 = scalar_select 0, %s6, %s4
  $region1: #{tpu_custom_call.1} parent=0
    #allocation2 [shape = 'u8[131072]{0}', space=vmem, size = 0x20000, scoped, tag = 'output window, operand 0']
    #allocation3 [shape = 's32[2]{0}', space=sflag, size = 0x8, scoped, tag = 'scoped memory for tpu_custom_call.1']
    %8 = vsyncpa [#allocation3], 0
    %s9 = scalar_lea.sflag [#allocation3], 1
    %10 = vsyncpa %s9, 0
    loop: start=0, step=1, limit=4
    $region2: #{tpu_custom_call.1} parent=1 // loop_pre_header
      _
    $region3: #{tpu_custom_call.1} parent=1 // loop_header
      %s12 = sphi 0, %s16
      %p13 = scmp.ge.s32.totalorder %s12, 4
      %s22 = sphi 0, %s24
      %s25 = sphi 0, %s22
      %s26 = sphi 0, %s25
      %s42 = sphi 0, %s26
      %s46 = sphi 0, %s46
      %s48 = sphi 0, %s46
      %s49 = sphi 0, %s48
      %s63 = sphi 0, %s49
      %s69 = sphi 0, %s71
      %s72 = sphi 0, %s69
      %s73 = sphi 0, %s72
      %s89 = sphi 0, %s73
      %s95 = sphi 0, %s97
      %s98 = sphi 0, %s95
      %s99 = sphi 0, %s98
      %s115 = sphi 0, %s99
    $region4: #{tpu_custom_call.1} parent=1 // loop_header_branch
      %15 = sbr.rel (%p13) target = $region8
    $region5: #{tpu_custom_call.1} parent=1 // loop_body
      %s17 = ssub.s32 %s12, 1
      %s18 = ssub.s32 %s12, 2
      %s19 = sadd.s32 %s12, 1
      %s20 = ssub.s32 %s12, %s19
      %p21 = scmp.eq.s32.totalorder %s20, 0
      %s23 = sadd.s32 %s22, 1
      %s24 = scalar_select %p21, %s22, %s23
      %p27 = pneg %p21
      %p28 = scmp.eq.s32.totalorder %s12, 1
      %p29 = por %p27, %p28
      %p30 = scmp.ne.s32.totalorder %s22, %s25
      %p31 = scmp.eq.s32.totalorder %s12, 0
      %p32 = por %p30, %p31
      %p33 = scmp.ne.s32.totalorder %s22, %s25
      %p34 = scmp.eq.s32.totalorder %s17, 1
      %p35 = por %p33, %p34
      %p36 = scmp.ne.s32.totalorder %s25, %s26
      %p37 = scmp.eq.s32.totalorder %s17, 0
      %p38 = por %p36, %p37
      %p39 = scmp.ne.s32.totalorder %s25, %s26
      %p40 = scmp.eq.s32.totalorder %s18, 1
      %p41 = por %p39, %p40
      %p43 = scmp.ne.s32.totalorder %s26, %s42
      %p44 = scmp.eq.s32.totalorder %s18, 0
      %p45 = por %p43, %p44
      %s47 = sadd.s32 %s46, 1
      %p50 = scmp.eq.s32.totalorder %s12, 1
      %p51 = scmp.ne.s32.totalorder %s46, %s48
      %p52 = scmp.eq.s32.totalorder %s12, 0
      %p53 = por %p51, %p52
      %p54 = scmp.ne.s32.totalorder %s46, %s48
      %p55 = scmp.eq.s32.totalorder %s17, 1
      %p56 = por %p54, %p55
      %p57 = scmp.ne.s32.totalorder %s48, %s49
      %p58 = scmp.eq.s32.totalorder %s17, 0
      %p59 = por %p57, %p58
      %p60 = scmp.ne.s32.totalorder %s48, %s49
      %p61 = scmp.eq.s32.totalorder %s18, 1
      %p62 = por %p60, %p61
      %p64 = scmp.ne.s32.totalorder %s49, %s63
      %p65 = scmp.eq.s32.totalorder %s18, 0
      %p66 = por %p64, %p65
      %s67 = ssub.s32 %s12, %s19
      %p68 = scmp.eq.s32.totalorder %s67, 0
      %s70 = sadd.s32 %s69, 1
      %s71 = scalar_select %p68, %s69, %s70
      %p74 = pneg %p68
      %p75 = scmp.eq.s32.totalorder %s12, 1
      %p76 = por %p74, %p75
      %p77 = scmp.ne.s32.totalorder %s69, %s72
      %p78 = scmp.eq.s32.totalorder %s12, 0
      %p79 = por %p77, %p78
      %p80 = scmp.ne.s32.totalorder %s69, %s72
      %p81 = scmp.eq.s32.totalorder %s17, 1
      %p82 = por %p80, %p81
      %p83 = scmp.ne.s32.totalorder %s72, %s73
      %p84 = scmp.eq.s32.totalorder %s17, 0
      %p85 = por %p83, %p84
      %p86 = scmp.ne.s32.totalorder %s72, %s73
      %p87 = scmp.eq.s32.totalorder %s18, 1
      %p88 = por %p86, %p87
      %p90 = scmp.ne.s32.totalorder %s73, %s89
      %p91 = scmp.eq.s32.totalorder %s18, 0
      %p92 = por %p90, %p91
      %s93 = ssub.s32 %s12, %s19
      %p94 = scmp.eq.s32.totalorder %s93, 0
      %s96 = sadd.s32 %s95, 1
      %s97 = scalar_select %p94, %s95, %s96
      %p100 = pneg %p94
      %p101 = scmp.eq.s32.totalorder %s12, 1
      %p102 = por %p100, %p101
      %p103 = scmp.ne.s32.totalorder %s95, %s98
      %p104 = scmp.eq.s32.totalorder %s12, 0
      %p105 = por %p103, %p104
      %p106 = scmp.ne.s32.totalorder %s95, %s98
      %p107 = scmp.eq.s32.totalorder %s17, 1
      %p108 = por %p106, %p107
      %p109 = scmp.ne.s32.totalorder %s98, %s99
      %p110 = scmp.eq.s32.totalorder %s17, 0
      %p111 = por %p109, %p110
      %p112 = scmp.ne.s32.totalorder %s98, %s99
      %p113 = scmp.eq.s32.totalorder %s18, 1
      %p114 = por %p112, %p113
      %p116 = scmp.ne.s32.totalorder %s99, %s115
      %p117 = scmp.eq.s32.totalorder %s18, 0
      %p118 = por %p116, %p117
      %p119 = scmp.le.s32.totalorder 1, %s12
      %p120 = scmp.lt.s32.totalorder %s12, 3
      %p121 = pnand %p119, %p120
      %p122 = pneg %p121
      // Predicated region
      $region9: #{tpu_custom_call.1} parent=5 // pred_check
        _
      $region10: #{tpu_custom_call.1} parent=5 // pred_check_branch
        %124 = sbr.rel (%p121) target = $region12
      $region11: #{tpu_custom_call.1} parent=5 // pred_region
        %s125 = ssub.s32 %s12, 1
        // Predicated region
        $region13: #{tpu_custom_call.1} parent=11 // pred_check
          %p126 = pneg %p59
        $region14: #{tpu_custom_call.1} parent=11 // pred_check_branch
          %128 = sbr.rel (%p126) target = $region16
        $region15: #{tpu_custom_call.1} parent=11 // pred_region
          _
        $region16: #{tpu_custom_call.1} parent=11 // pred_fallthru
          _
      $region12: #{tpu_custom_call.1} parent=5 // pred_fallthru
        _
      %p129 = scmp.lt.s32.totalorder %s12, 2
      // Predicated region
      $region17: #{tpu_custom_call.1} parent=5 // pred_check
        %p130 = pneg %p129
      $region18: #{tpu_custom_call.1} parent=5 // pred_check_branch
        %132 = sbr.rel (%p130) target = $region20
      $region19: #{tpu_custom_call.1} parent=5 // pred_region
        // Predicated region
        $region21: #{tpu_custom_call.1} parent=19 // pred_check
          %p133 = pneg %p32
        $region22: #{tpu_custom_call.1} parent=19 // pred_check_branch
          %135 = sbr.rel (%p133) target = $region24
        $region23: #{tpu_custom_call.1} parent=19 // pred_region
          %s136 = smul.u32 32, %s12
          %p137 = scmp.lt.s32.totalorder %s136, 63
          %s138 = scalar_select %p137, %s136, 63
          %s139 = smul.addr %s138, 8
          %s140 = scalar_lea.vmem %s0, %s139
          %s141 = smul.u32 32, %s12
        $region24: #{tpu_custom_call.1} parent=19 // pred_fallthru
          _
        // Predicated region
        $region25: #{tpu_custom_call.1} parent=19 // pred_check
          %p142 = pneg %p79
        $region26: #{tpu_custom_call.1} parent=19 // pred_check_branch
          %144 = sbr.rel (%p142) target = $region28
        $region27: #{tpu_custom_call.1} parent=19 // pred_region
          %s145 = smul.u32 32, %s12
          %p146 = scmp.lt.s32.totalorder %s145, 63
          %s147 = scalar_select %p146, %s145, 63
          %s148 = smul.addr %s147, 8
          %s149 = scalar_lea.vmem %s2, %s148
          %s150 = smul.u32 32, %s12
        $region28: #{tpu_custom_call.1} parent=19 // pred_fallthru
          _
      $region20: #{tpu_custom_call.1} parent=5 // pred_fallthru
        _
      %p151 = scmp.le.s32.totalorder 1, %s12
      %p152 = scmp.lt.s32.totalorder %s12, 3
      %p153 = pnand %p151, %p152
      %p154 = pneg %p153
      // Predicated region
      $region29: #{tpu_custom_call.1} parent=5 // pred_check
        _
      $region30: #{tpu_custom_call.1} parent=5 // pred_check_branch
        %156 = sbr.rel (%p153) target = $region32
      $region31: #{tpu_custom_call.1} parent=5 // pred_region
        %s157 = ssub.s32 %s12, 1
        %s158 = smul.u32 32, %s17
        %p159 = scmp.lt.s32.totalorder %s158, 63
        %s160 = scalar_select %p159, %s158, 63
        %s161 = smul.addr %s160, 8
        %s162 = scalar_lea.vmem %s0, %s161
        %p163 = pneg %p38
        %p164 = pneg %p35
        %p165 = pneg %p59
        %p166 = pneg %p56
        %s167 = smul.u32 32, %s17
        %p168 = scmp.lt.s32.totalorder %s167, 63
        %s169 = scalar_select %p168, %s167, 63
        %s170 = smul.addr %s169, 8
        %s171 = scalar_lea.vmem %s2, %s170
        %p172 = pneg %p85
        %p173 = pneg %p82
        %p174 = pneg %p111
        %p175 = pneg %p108
        %s176 = sand.u32 %s98, 1
        %s177 = scalar_lea.sflag [#allocation3], %s176
        %s178 = sand.u32 %s98, 1
        %s179 = smul.addr %s178, 128
        %s180 = scalar_lea.vmem [#allocation2], %s179
        %s181 = smul.u32 32, %s17
        %p182 = scmp.lt.s32.totalorder %s181, 63
        %s183 = scalar_select %p182, %s181, 63
        %s184 = smul.addr %s183, 8
        %s185 = scalar_lea.vmem %s0, %s184
        %s186 = smul.u32 32, %s17
        %s187 = smul.u32 32, %s17
        %p188 = scmp.lt.s32.totalorder %s187, 63
        %s189 = scalar_select %p188, %s187, 63
        %s190 = smul.addr %s189, 8
        %s191 = scalar_lea.vmem %s2, %s190
        %s192 = smul.u32 32, %s17
        %s193 = smul.u32 32, %s17
        %v194 = vld [vmem:[%s185] sm:$0xff]
        %v195 = vld [vmem:[%s185 + $0x8] sm:$0xff]
        %v196 = vld [vmem:[%s185 + $0x10] sm:$0xff]
        %v197 = vld [vmem:[%s185 + $0x18] sm:$0xff]
        %v198 = vld [vmem:[%s185 + $0x20] sm:$0xff]
        %v199 = vld [vmem:[%s185 + $0x28] sm:$0xff]
        %v200 = vld [vmem:[%s185 + $0x30] sm:$0xff]
        %v201 = vld [vmem:[%s185 + $0x38] sm:$0xff]
        %v202 = vld [vmem:[%s185 + $0x40] sm:$0xff]
        %v203 = vld [vmem:[%s185 + $0x48] sm:$0xff]
        %v204 = vld [vmem:[%s185 + $0x50] sm:$0xff]
        %v205 = vld [vmem:[%s185 + $0x58] sm:$0xff]
        %v206 = vld [vmem:[%s185 + $0x60] sm:$0xff]
        %v207 = vld [vmem:[%s185 + $0x68] sm:$0xff]
        %v208 = vld [vmem:[%s185 + $0x70] sm:$0xff]
        %v209 = vld [vmem:[%s185 + $0x78] sm:$0xff]
        %v210 = vld [vmem:[%s185 + $0x80] sm:$0xff]
        %v211 = vld [vmem:[%s185 + $0x88] sm:$0xff]
        %v212 = vld [vmem:[%s185 + $0x90] sm:$0xff]
        %v213 = vld [vmem:[%s185 + $0x98] sm:$0xff]
        %v214 = vld [vmem:[%s185 + $0xa0] sm:$0xff]
        %v215 = vld [vmem:[%s185 + $0xa8] sm:$0xff]
        %v216 = vld [vmem:[%s185 + $0xb0] sm:$0xff]
        %v217 = vld [vmem:[%s185 + $0xb8] sm:$0xff]
        %v218 = vld [vmem:[%s185 + $0xc0] sm:$0xff]
        %v219 = vld [vmem:[%s185 + $0xc8] sm:$0xff]
        %v220 = vld [vmem:[%s185 + $0xd0] sm:$0xff]
        %v221 = vld [vmem:[%s185 + $0xd8] sm:$0xff]
        %v222 = vld [vmem:[%s185 + $0xe0] sm:$0xff]
        %v223 = vld [vmem:[%s185 + $0xe8] sm:$0xff]
        %v224 = vld [vmem:[%s185 + $0xf0] sm:$0xff]
        %v225 = vld [vmem:[%s185 + $0xf8] sm:$0xff]
        %v226 = vld [vmem:[%s1] sm:$0xff]
        %v227 = vld [vmem:[%s1 + $0x8] sm:$0xff]
        %vm228 = vcmask 130048
        %v230 = vsel %vm228, %v194, 0
        %v233 = vsel %vm228, %v195, 0
        %v236 = vsel %vm228, %v196, 0
        %v239 = vsel %vm228, %v197, 0
        %v242 = vsel %vm228, %v198, 0
        %v245 = vsel %vm228, %v199, 0
        %v248 = vsel %vm228, %v200, 0
        %v251 = vsel %vm228, %v201, 0
        %v254 = vsel %vm228, %v202, 0
        %v257 = vsel %vm228, %v203, 0
        %v260 = vsel %vm228, %v204, 0
        %v263 = vsel %vm228, %v205, 0
        %v266 = vsel %vm228, %v206, 0
        %v269 = vsel %vm228, %v207, 0
        %v272 = vsel %vm228, %v208, 0
        %v275 = vsel %vm228, %v209, 0
        %v278 = vsel %vm228, %v210, 0
        %v281 = vsel %vm228, %v211, 0
        %v284 = vsel %vm228, %v212, 0
        %v287 = vsel %vm228, %v213, 0
        %v290 = vsel %vm228, %v214, 0
        %v293 = vsel %vm228, %v215, 0
        %v296 = vsel %vm228, %v216, 0
        %v299 = vsel %vm228, %v217, 0
        %v302 = vsel %vm228, %v218, 0
        %v305 = vsel %vm228, %v219, 0
        %v308 = vsel %vm228, %v220, 0
        %v311 = vsel %vm228, %v221, 0
        %v314 = vsel %vm228, %v222, 0
        %v317 = vsel %vm228, %v223, 0
        %v320 = vsel %vm228, %v224, 0
        %v323 = vsel %vm228, %v225, 0
        %325 = vmatprep.subr.mxu0 0.0
        %326 = vmatpush1.msra.mxu0 %v226
        %327 = vmatprep.subr.mxu0 0.0
        %328 = vmatpush1.msra.mxu0 %v227
        %329 = vmatprep.subr.mxu0 0.0
        %330 = vmatpush1.msra.mxu0 0.0
        %331 = vmatprep.subr.mxu0 0.0
        %332 = vmatpush1.msra.mxu0 0.0
        %333 = vmatprep.subr.mxu0 0.0
        %334 = vmatpush1.msra.mxu0 0.0
        %335 = vmatprep.subr.mxu0 0.0
        %336 = vmatpush1.msra.mxu0 0.0
        %337 = vmatprep.subr.mxu0 0.0
        %338 = vmatpush1.msra.mxu0 0.0
        %339 = vmatprep.subr.mxu0 0.0
        %340 = vmatpush1.msra.mxu0 0.0
        %341 = vmatprep.subr.mxu0 0.0
        %342 = vmatpush1.msra.mxu0 0.0
        %343 = vmatprep.subr.mxu0 0.0
        %344 = vmatpush1.msra.mxu0 0.0
        %345 = vmatprep.subr.mxu0 0.0
        %346 = vmatpush1.msra.mxu0 0.0
        %347 = vmatprep.subr.mxu0 0.0
        %348 = vmatpush1.msra.mxu0 0.0
        %349 = vmatprep.subr.mxu0 0.0
        %350 = vmatpush1.msra.mxu0 0.0
        %351 = vmatprep.subr.mxu0 0.0
        %352 = vmatpush1.msra.mxu0 0.0
        %353 = vmatprep.subr.mxu0 0.0
        %354 = vmatpush1.msra.mxu0 0.0
        %355 = vmatprep.subr.mxu0 0.0
        %356 = vmatpush1.msra.mxu0 0.0
        %357 = vmatprep.subr.mxu0 0.0
        %358 = vmatpush1.msra.mxu0 0.0
        %359 = vmatprep.subr.mxu0 0.0
        %360 = vmatpush1.msra.mxu0 0.0
        %361 = vmatprep.subr.mxu0 0.0
        %362 = vmatpush1.msra.mxu0 0.0
        %363 = vmatprep.subr.mxu0 0.0
        %364 = vmatpush1.msra.mxu0 0.0
        %365 = vmatprep.subr.mxu0 0.0
        %366 = vmatpush1.msra.mxu0 0.0
        %367 = vmatprep.subr.mxu0 0.0
        %368 = vmatpush1.msra.mxu0 0.0
        %369 = vmatprep.subr.mxu0 0.0
        %370 = vmatpush1.msra.mxu0 0.0
        %371 = vmatprep.subr.mxu0 0.0
        %372 = vmatpush1.msra.mxu0 0.0
        %373 = vmatprep.subr.mxu0 0.0
        %374 = vmatpush1.msra.mxu0 0.0
        %375 = vmatprep.subr.mxu0 0.0
        %376 = vmatpush1.msra.mxu0 0.0
        %377 = vmatprep.subr.mxu0 0.0
        %378 = vmatpush1.msra.mxu0 0.0
        %379 = vmatprep.subr.mxu0 0.0
        %380 = vmatpush1.msra.mxu0 0.0
        %381 = vmatprep.subr.mxu0 0.0
        %382 = vmatpush1.msra.mxu0 0.0
        %383 = vmatprep.subr.mxu0 0.0
        %384 = vmatpush1.msra.mxu0 0.0
        %385 = vmatprep.subr.mxu0 0.0
        %386 = vmatpush1.msra.mxu0 0.0
        %387 = vmatprep.subr.mxu0 0.0
        %388 = vmatpush1.msra.mxu0 0.0
        %389 = vmatprep.mubr.f32.mxu0 0.0
        %390 = vmatmul.mubr.f32.gmra.mrb[0].mxu0 %v230
        %v391 = vpop.f32.mrb[0].mxu0
        %v392 = vadd.f32 0.0, %v391
        %v393 = vpop.f32.mrb[0].mxu0
        %394 = vmatprep.mubr.f32.mxu0 0.0
        %395 = vmatmul.mubr.f32.gmra.mrb[0].mxu0 %v233
        %v396 = vpop.f32.mrb[0].mxu0
        %v397 = vadd.f32 0.0, %v396
        %v398 = vpop.f32.mrb[0].mxu0
        %399 = vmatprep.mubr.f32.mxu0 0.0
        %400 = vmatmul.mubr.f32.gmra.mrb[0].mxu0 %v236
        %v401 = vpop.f32.mrb[0].mxu0
        %v402 = vadd.f32 0.0, %v401
        %v403 = vpop.f32.mrb[0].mxu0
        %404 = vmatprep.mubr.f32.mxu0 0.0
        %405 = vmatmul.mubr.f32.gmra.mrb[0].mxu0 %v239
        %v406 = vpop.f32.mrb[0].mxu0
        %v407 = vadd.f32 0.0, %v406
        %v408 = vpop.f32.mrb[0].mxu0
        %409 = vmatprep.mubr.f32.mxu0 0.0
        %410 = vmatmul.mubr.f32.gmra.mrb[0].mxu0 %v242
        %v411 = vpop.f32.mrb[0].mxu0
        %v412 = vadd.f32 0.0, %v411
        %v413 = vpop.f32.mrb[0].mxu0
        %414 = vmatprep.mubr.f32.mxu0 0.0
        %415 = vmatmul.mubr.f32.gmra.mrb[0].mxu0 %v245
        %v416 = vpop.f32.mrb[0].mxu0
        %v417 = vadd.f32 0.0, %v416
        %v418 = vpop.f32.mrb[0].mxu0
        %419 = vmatprep.mubr.f32.mxu0 0.0
        %420 = vmatmul.mubr.f32.gmra.mrb[0].mxu0 %v248
        %v421 = vpop.f32.mrb[0].mxu0
        %v422 = vadd.f32 0.0, %v421
        %v423 = vpop.f32.mrb[0].mxu0
        %424 = vmatprep.mubr.f32.mxu0 0.0
        %425 = vmatmul.mubr.f32.gmra.mrb[0].mxu0 %v251
        %v426 = vpop.f32.mrb[0].mxu0
        %v427 = vadd.f32 0.0, %v426
        %v428 = vpop.f32.mrb[0].mxu0
        %429 = vmatprep.mubr.f32.mxu0 0.0
        %430 = vmatmul.mubr.f32.gmra.mrb[0].mxu0 %v254
        %v431 = vpop.f32.mrb[0].mxu0
        %v432 = vadd.f32 0.0, %v431
        %v433 = vpop.f32.mrb[0].mxu0
        %434 = vmatprep.mubr.f32.mxu0 0.0
        %435 = vmatmul.mubr.f32.gmra.mrb[0].mxu0 %v257
        %v436 = vpop.f32.mrb[0].mxu0
        %v437 = vadd.f32 0.0, %v436
        %v438 = vpop.f32.mrb[0].mxu0
        %439 = vmatprep.mubr.f32.mxu0 0.0
        %440 = vmatmul.mubr.f32.gmra.mrb[0].mxu0 %v260
        %v441 = vpop.f32.mrb[0].mxu0
        %v442 = vadd.f32 0.0, %v441
        %v443 = vpop.f32.mrb[0].mxu0
        %444 = vmatprep.mubr.f32.mxu0 0.0
        %445 = vmatmul.mubr.f32.gmra.mrb[0].mxu0 %v263
        %v446 = vpop.f32.mrb[0].mxu0
        %v447 = vadd.f32 0.0, %v446
        %v448 = vpop.f32.mrb[0].mxu0
        %449 = vmatprep.mubr.f32.mxu0 0.0
        %450 = vmatmul.mubr.f32.gmra.mrb[0].mxu0 %v266
        %v451 = vpop.f32.mrb[0].mxu0
        %v452 = vadd.f32 0.0, %v451
        %v453 = vpop.f32.mrb[0].mxu0
        %454 = vmatprep.mubr.f32.mxu0 0.0
        %455 = vmatmul.mubr.f32.gmra.mrb[0].mxu0 %v269
        %v456 = vpop.f32.mrb[0].mxu0
        %v457 = vadd.f32 0.0, %v456
        %v458 = vpop.f32.mrb[0].mxu0
        %459 = vmatprep.mubr.f32.mxu0 0.0
        %460 = vmatmul.mubr.f32.gmra.mrb[0].mxu0 %v272
        %v461 = vpop.f32.mrb[0].mxu0
        %v462 = vadd.f32 0.0, %v461
        %v463 = vpop.f32.mrb[0].mxu0
        %464 = vmatprep.mubr.f32.mxu0 0.0
        %465 = vmatmul.mubr.f32.gmra.mrb[0].mxu0 %v275
        %v466 = vpop.f32.mrb[0].mxu0
        %v467 = vadd.f32 0.0, %v466
        %v468 = vpop.f32.mrb[0].mxu0
        %469 = vmatprep.mubr.f32.mxu0 0.0
        %470 = vmatmul.mubr.f32.gmra.mrb[0].mxu0 %v278
        %v471 = vpop.f32.mrb[0].mxu0
        %v472 = vadd.f32 0.0, %v471
        %v473 = vpop.f32.mrb[0].mxu0
        %474 = vmatprep.mubr.f32.mxu0 0.0
        %475 = vmatmul.mubr.f32.gmra.mrb[0].mxu0 %v281
        %v476 = vpop.f32.mrb[0].mxu0
        %v477 = vadd.f32 0.0, %v476
        %v478 = vpop.f32.mrb[0].mxu0
        %479 = vmatprep.mubr.f32.mxu0 0.0
        %480 = vmatmul.mubr.f32.gmra.mrb[0].mxu0 %v284
        %v481 = vpop.f32.mrb[0].mxu0
        %v482 = vadd.f32 0.0, %v481
        %v483 = vpop.f32.mrb[0].mxu0
        %484 = vmatprep.mubr.f32.mxu0 0.0
        %485 = vmatmul.mubr.f32.gmra.mrb[0].mxu0 %v287
        %v486 = vpop.f32.mrb[0].mxu0
        %v487 = vadd.f32 0.0, %v486
        %v488 = vpop.f32.mrb[0].mxu0
        %489 = vmatprep.mubr.f32.mxu0 0.0
        %490 = vmatmul.mubr.f32.gmra.mrb[0].mxu0 %v290
        %v491 = vpop.f32.mrb[0].mxu0
        %v492 = vadd.f32 0.0, %v491
        %v493 = vpop.f32.mrb[0].mxu0
        %494 = vmatprep.mubr.f32.mxu0 0.0
        %495 = vmatmul.mubr.f32.gmra.mrb[0].mxu0 %v293
        %v496 = vpop.f32.mrb[0].mxu0
        %v497 = vadd.f32 0.0, %v496
        %v498 = vpop.f32.mrb[0].mxu0
        %499 = vmatprep.mubr.f32.mxu0 0.0
        %500 = vmatmul.mubr.f32.gmra.mrb[0].mxu0 %v296
        %v501 = vpop.f32.mrb[0].mxu0
        %v502 = vadd.f32 0.0, %v501
        %v503 = vpop.f32.mrb[0].mxu0
        %504 = vmatprep.mubr.f32.mxu0 0.0
        %505 = vmatmul.mubr.f32.gmra.mrb[0].mxu0 %v299
        %v506 = vpop.f32.mrb[0].mxu0
        %v507 = vadd.f32 0.0, %v506
        %v508 = vpop.f32.mrb[0].mxu0
        %509 = vmatprep.mubr.f32.mxu0 0.0
        %510 = vmatmul.mubr.f32.gmra.mrb[0].mxu0 %v302
        %v511 = vpop.f32.mrb[0].mxu0
        %v512 = vadd.f32 0.0, %v511
        %v513 = vpop.f32.mrb[0].mxu0
        %514 = vmatprep.mubr.f32.mxu0 0.0
        %515 = vmatmul.mubr.f32.gmra.mrb[0].mxu0 %v305
        %v516 = vpop.f32.mrb[0].mxu0
        %v517 = vadd.f32 0.0, %v516
        %v518 = vpop.f32.mrb[0].mxu0
        %519 = vmatprep.mubr.f32.mxu0 0.0
        %520 = vmatmul.mubr.f32.gmra.mrb[0].mxu0 %v308
        %v521 = vpop.f32.mrb[0].mxu0
        %v522 = vadd.f32 0.0, %v521
        %v523 = vpop.f32.mrb[0].mxu0
        %524 = vmatprep.mubr.f32.mxu0 0.0
        %525 = vmatmul.mubr.f32.gmra.mrb[0].mxu0 %v311
        %v526 = vpop.f32.mrb[0].mxu0
        %v527 = vadd.f32 0.0, %v526
        %v528 = vpop.f32.mrb[0].mxu0
        %529 = vmatprep.mubr.f32.mxu0 0.0
        %530 = vmatmul.mubr.f32.gmra.mrb[0].mxu0 %v314
        %v531 = vpop.f32.mrb[0].mxu0
        %v532 = vadd.f32 0.0, %v531
        %v533 = vpop.f32.mrb[0].mxu0
        %534 = vmatprep.mubr.f32.mxu0 0.0
        %535 = vmatmul.mubr.f32.gmra.mrb[0].mxu0 %v317
        %v536 = vpop.f32.mrb[0].mxu0
        %v537 = vadd.f32 0.0, %v536
        %v538 = vpop.f32.mrb[0].mxu0
        %539 = vmatprep.mubr.f32.mxu0 0.0
        %540 = vmatmul.mubr.f32.gmra.mrb[0].mxu0 %v320
        %v541 = vpop.f32.mrb[0].mxu0
        %v542 = vadd.f32 0.0, %v541
        %v543 = vpop.f32.mrb[0].mxu0
        %544 = vmatprep.mubr.f32.mxu0 0.0
        %545 = vmatmul.mubr.f32.gmra.mrb[0].mxu0 %v323
        %v546 = vpop.f32.mrb[0].mxu0
        %v547 = vadd.f32 0.0, %v546
        %v548 = vpop.f32.mrb[0].mxu0
        %549 = vdwg.mxu0
        %v550 = vld [vmem:[%s191] sm:$0xff]
        %v551 = vld [vmem:[%s191 + $0x8] sm:$0xff]
        %v552 = vld [vmem:[%s191 + $0x10] sm:$0xff]
        %v553 = vld [vmem:[%s191 + $0x18] sm:$0xff]
        %v554 = vld [vmem:[%s191 + $0x20] sm:$0xff]
        %v555 = vld [vmem:[%s191 + $0x28] sm:$0xff]
        %v556 = vld [vmem:[%s191 + $0x30] sm:$0xff]
        %v557 = vld [vmem:[%s191 + $0x38] sm:$0xff]
        %v558 = vld [vmem:[%s191 + $0x40] sm:$0xff]
        %v559 = vld [vmem:[%s191 + $0x48] sm:$0xff]
        %v560 = vld [vmem:[%s191 + $0x50] sm:$0xff]
        %v561 = vld [vmem:[%s191 + $0x58] sm:$0xff]
        %v562 = vld [vmem:[%s191 + $0x60] sm:$0xff]
        %v563 = vld [vmem:[%s191 + $0x68] sm:$0xff]
        %v564 = vld [vmem:[%s191 + $0x70] sm:$0xff]
        %v565 = vld [vmem:[%s191 + $0x78] sm:$0xff]
        %v566 = vld [vmem:[%s191 + $0x80] sm:$0xff]
        %v567 = vld [vmem:[%s191 + $0x88] sm:$0xff]
        %v568 = vld [vmem:[%s191 + $0x90] sm:$0xff]
        %v569 = vld [vmem:[%s191 + $0x98] sm:$0xff]
        %v570 = vld [vmem:[%s191 + $0xa0] sm:$0xff]
        %v571 = vld [vmem:[%s191 + $0xa8] sm:$0xff]
        %v572 = vld [vmem:[%s191 + $0xb0] sm:$0xff]
        %v573 = vld [vmem:[%s191 + $0xb8] sm:$0xff]
        %v574 = vld [vmem:[%s191 + $0xc0] sm:$0xff]
        %v575 = vld [vmem:[%s191 + $0xc8] sm:$0xff]
        %v576 = vld [vmem:[%s191 + $0xd0] sm:$0xff]
        %v577 = vld [vmem:[%s191 + $0xd8] sm:$0xff]
        %v578 = vld [vmem:[%s191 + $0xe0] sm:$0xff]
        %v579 = vld [vmem:[%s191 + $0xe8] sm:$0xff]
        %v580 = vld [vmem:[%s191 + $0xf0] sm:$0xff]
        %v581 = vld [vmem:[%s191 + $0xf8] sm:$0xff]
        %583 = vset.pattern.permute.xlu0 0
        %584 = vperm.xlu0 %583, %v550
        %v585 = vpop.permute.xlu0 %584
        %588 = vset.pattern.permute.xlu0 0
        %589 = vperm.xlu0 %588, %v551
        %v590 = vpop.permute.xlu0 %589
        %593 = vset.pattern.permute.xlu0 0
        %594 = vperm.xlu0 %593, %v552
        %v595 = vpop.permute.xlu0 %594
        %598 = vset.pattern.permute.xlu0 0
        %599 = vperm.xlu0 %598, %v553
        %v600 = vpop.permute.xlu0 %599
        %603 = vset.pattern.permute.xlu0 0
        %604 = vperm.xlu0 %603, %v554
        %v605 = vpop.permute.xlu0 %604
        %608 = vset.pattern.permute.xlu0 0
        %609 = vperm.xlu0 %608, %v555
        %v610 = vpop.permute.xlu0 %609
        %613 = vset.pattern.permute.xlu0 0
        %614 = vperm.xlu0 %613, %v556
        %v615 = vpop.permute.xlu0 %614
        %618 = vset.pattern.permute.xlu0 0
        %619 = vperm.xlu0 %618, %v557
        %v620 = vpop.permute.xlu0 %619
        %623 = vset.pattern.permute.xlu0 0
        %624 = vperm.xlu0 %623, %v558
        %v625 = vpop.permute.xlu0 %624
        %628 = vset.pattern.permute.xlu0 0
        %629 = vperm.xlu0 %628, %v559
        %v630 = vpop.permute.xlu0 %629
        %633 = vset.pattern.permute.xlu0 0
        %634 = vperm.xlu0 %633, %v560
        %v635 = vpop.permute.xlu0 %634
        %638 = vset.pattern.permute.xlu0 0
        %639 = vperm.xlu0 %638, %v561
        %v640 = vpop.permute.xlu0 %639
        %643 = vset.pattern.permute.xlu0 0
        %644 = vperm.xlu0 %643, %v562
        %v645 = vpop.permute.xlu0 %644
        %648 = vset.pattern.permute.xlu0 0
        %649 = vperm.xlu0 %648, %v563
        %v650 = vpop.permute.xlu0 %649
        %653 = vset.pattern.permute.xlu0 0
        %654 = vperm.xlu0 %653, %v564
        %v655 = vpop.permute.xlu0 %654
        %658 = vset.pattern.permute.xlu0 0
        %659 = vperm.xlu0 %658, %v565
        %v660 = vpop.permute.xlu0 %659
        %663 = vset.pattern.permute.xlu0 0
        %664 = vperm.xlu0 %663, %v566
        %v665 = vpop.permute.xlu0 %664
        %668 = vset.pattern.permute.xlu0 0
        %669 = vperm.xlu0 %668, %v567
        %v670 = vpop.permute.xlu0 %669
        %673 = vset.pattern.permute.xlu0 0
        %674 = vperm.xlu0 %673, %v568
        %v675 = vpop.permute.xlu0 %674
        %678 = vset.pattern.permute.xlu0 0
        %679 = vperm.xlu0 %678, %v569
        %v680 = vpop.permute.xlu0 %679
        %683 = vset.pattern.permute.xlu0 0
        %684 = vperm.xlu0 %683, %v570
        %v685 = vpop.permute.xlu0 %684
        %688 = vset.pattern.permute.xlu0 0
        %689 = vperm.xlu0 %688, %v571
        %v690 = vpop.permute.xlu0 %689
        %693 = vset.pattern.permute.xlu0 0
        %694 = vperm.xlu0 %693, %v572
        %v695 = vpop.permute.xlu0 %694
        %698 = vset.pattern.permute.xlu0 0
        %699 = vperm.xlu0 %698, %v573
        %v700 = vpop.permute.xlu0 %699
        %703 = vset.pattern.permute.xlu0 0
        %704 = vperm.xlu0 %703, %v574
        %v705 = vpop.permute.xlu0 %704
        %708 = vset.pattern.permute.xlu0 0
        %709 = vperm.xlu0 %708, %v575
        %v710 = vpop.permute.xlu0 %709
        %713 = vset.pattern.permute.xlu0 0
        %714 = vperm.xlu0 %713, %v576
        %v715 = vpop.permute.xlu0 %714
        %718 = vset.pattern.permute.xlu0 0
        %719 = vperm.xlu0 %718, %v577
        %v720 = vpop.permute.xlu0 %719
        %723 = vset.pattern.permute.xlu0 0
        %724 = vperm.xlu0 %723, %v578
        %v725 = vpop.permute.xlu0 %724
        %728 = vset.pattern.permute.xlu0 0
        %729 = vperm.xlu0 %728, %v579
        %v730 = vpop.permute.xlu0 %729
        %733 = vset.pattern.permute.xlu0 0
        %734 = vperm.xlu0 %733, %v580
        %v735 = vpop.permute.xlu0 %734
        %738 = vset.pattern.permute.xlu0 0
        %739 = vperm.xlu0 %738, %v581
        %v740 = vpop.permute.xlu0 %739
        %v742 = vmul.f32 %v585, %v392
        %v743 = vmul.f32 %v590, %v397
        %v744 = vmul.f32 %v595, %v402
        %v745 = vmul.f32 %v600, %v407
        %v746 = vmul.f32 %v605, %v412
        %v747 = vmul.f32 %v610, %v417
        %v748 = vmul.f32 %v615, %v422
        %v749 = vmul.f32 %v620, %v427
        %v750 = vmul.f32 %v625, %v432
        %v751 = vmul.f32 %v630, %v437
        %v752 = vmul.f32 %v635, %v442
        %v753 = vmul.f32 %v640, %v447
        %v754 = vmul.f32 %v645, %v452
        %v755 = vmul.f32 %v650, %v457
        %v756 = vmul.f32 %v655, %v462
        %v757 = vmul.f32 %v660, %v467
        %v758 = vmul.f32 %v665, %v472
        %v759 = vmul.f32 %v670, %v477
        %v760 = vmul.f32 %v675, %v482
        %v761 = vmul.f32 %v680, %v487
        %v762 = vmul.f32 %v685, %v492
        %v763 = vmul.f32 %v690, %v497
        %v764 = vmul.f32 %v695, %v502
        %v765 = vmul.f32 %v700, %v507
        %v766 = vmul.f32 %v705, %v512
        %v767 = vmul.f32 %v710, %v517
        %v768 = vmul.f32 %v715, %v522
        %v769 = vmul.f32 %v720, %v527
        %v770 = vmul.f32 %v725, %v532
        %v771 = vmul.f32 %v730, %v537
        %v772 = vmul.f32 %v735, %v542
        %v773 = vmul.f32 %v740, %v547
        %v774 = vpack.c.bf16 %v743, %v742
        %v775 = vpack.c.bf16 %v745, %v744
        %v776 = vpack.c.bf16 %v747, %v746
        %v777 = vpack.c.bf16 %v749, %v748
        %v778 = vpack.c.bf16 %v751, %v750
        %v779 = vpack.c.bf16 %v753, %v752
        %v780 = vpack.c.bf16 %v755, %v754
        %v781 = vpack.c.bf16 %v757, %v756
        %v782 = vpack.c.bf16 %v759, %v758
        %v783 = vpack.c.bf16 %v761, %v760
        %v784 = vpack.c.bf16 %v763, %v762
        %v785 = vpack.c.bf16 %v765, %v764
        %v786 = vpack.c.bf16 %v767, %v766
        %v787 = vpack.c.bf16 %v769, %v768
        %v788 = vpack.c.bf16 %v771, %v770
        %v789 = vpack.c.bf16 %v773, %v772
        %v806 = vunpack.c.l.b16 %v774
        %v807 = vunpack.c.h.b16 %v774
        %v808 = vunpack.c.l.b16 %v775
        %v809 = vunpack.c.h.b16 %v775
        %v810 = vunpack.c.l.b16 %v776
        %v811 = vunpack.c.h.b16 %v776
        %v812 = vunpack.c.l.b16 %v777
        %v813 = vunpack.c.h.b16 %v777
        %v814 = vunpack.c.l.b16 %v778
        %v815 = vunpack.c.h.b16 %v778
        %v816 = vunpack.c.l.b16 %v779
        %v817 = vunpack.c.h.b16 %v779
        %v818 = vunpack.c.l.b16 %v780
        %v819 = vunpack.c.h.b16 %v780
        %v820 = vunpack.c.l.b16 %v781
        %v821 = vunpack.c.h.b16 %v781
        %v822 = vunpack.c.l.b16 %v782
        %v823 = vunpack.c.h.b16 %v782
        %v824 = vunpack.c.l.b16 %v783
        %v825 = vunpack.c.h.b16 %v783
        %v826 = vunpack.c.l.b16 %v784
        %v827 = vunpack.c.h.b16 %v784
        %v828 = vunpack.c.l.b16 %v785
        %v829 = vunpack.c.h.b16 %v785
        %v830 = vunpack.c.l.b16 %v786
        %v831 = vunpack.c.h.b16 %v786
        %v832 = vunpack.c.l.b16 %v787
        %v833 = vunpack.c.h.b16 %v787
        %v834 = vunpack.c.l.b16 %v788
        %v835 = vunpack.c.h.b16 %v788
        %v836 = vunpack.c.l.b16 %v789
        %v837 = vunpack.c.h.b16 %v789
        %v838 = vpack.c.b16 %v806, %v806
        %v839 = vpack.c.b16 %v807, %v807
        %v840 = vpack.c.b16 %v808, %v808
        %v841 = vpack.c.b16 %v809, %v809
        %v842 = vpack.c.b16 %v810, %v810
        %v843 = vpack.c.b16 %v811, %v811
        %v844 = vpack.c.b16 %v812, %v812
        %v845 = vpack.c.b16 %v813, %v813
        %v846 = vpack.c.b16 %v814, %v814
        %v847 = vpack.c.b16 %v815, %v815
        %v848 = vpack.c.b16 %v816, %v816
        %v849 = vpack.c.b16 %v817, %v817
        %v850 = vpack.c.b16 %v818, %v818
        %v851 = vpack.c.b16 %v819, %v819
        %v852 = vpack.c.b16 %v820, %v820
        %v853 = vpack.c.b16 %v821, %v821
        %v854 = vpack.c.b16 %v822, %v822
        %v855 = vpack.c.b16 %v823, %v823
        %v856 = vpack.c.b16 %v824, %v824
        %v857 = vpack.c.b16 %v825, %v825
        %v858 = vpack.c.b16 %v826, %v826
        %v859 = vpack.c.b16 %v827, %v827
        %v860 = vpack.c.b16 %v828, %v828
        %v861 = vpack.c.b16 %v829, %v829
        %v862 = vpack.c.b16 %v830, %v830
        %v863 = vpack.c.b16 %v831, %v831
        %v864 = vpack.c.b16 %v832, %v832
        %v865 = vpack.c.b16 %v833, %v833
        %v866 = vpack.c.b16 %v834, %v834
        %v867 = vpack.c.b16 %v835, %v835
        %v868 = vpack.c.b16 %v836, %v836
        %v869 = vpack.c.b16 %v837, %v837
        %902 = vst [vmem:[%s180] sm:$0xf] %v838
        %903 = vst [vmem:[%s180 + $0x4] sm:$0xf] %v839
        %904 = vst [vmem:[%s180 + $0x8] sm:$0xf] %v840
        %905 = vst [vmem:[%s180 + $0xc] sm:$0xf] %v841
        %906 = vst [vmem:[%s180 + $0x10] sm:$0xf] %v842
        %907 = vst [vmem:[%s180 + $0x14] sm:$0xf] %v843
        %908 = vst [vmem:[%s180 + $0x18] sm:$0xf] %v844
        %909 = vst [vmem:[%s180 + $0x1c] sm:$0xf] %v845
        %910 = vst [vmem:[%s180 + $0x20] sm:$0xf] %v846
        %911 = vst [vmem:[%s180 + $0x24] sm:$0xf] %v847
        %912 = vst [vmem:[%s180 + $0x28] sm:$0xf] %v848
        %913 = vst [vmem:[%s180 + $0x2c] sm:$0xf] %v849
        %914 = vst [vmem:[%s180 + $0x30] sm:$0xf] %v850
        %915 = vst [vmem:[%s180 + $0x34] sm:$0xf] %v851
        %916 = vst [vmem:[%s180 + $0x38] sm:$0xf] %v852
        %917 = vst [vmem:[%s180 + $0x3c] sm:$0xf] %v853
        %918 = vst [vmem:[%s180 + $0x40] sm:$0xf] %v854
        %919 = vst [vmem:[%s180 + $0x44] sm:$0xf] %v855
        %920 = vst [vmem:[%s180 + $0x48] sm:$0xf] %v856
        %921 = vst [vmem:[%s180 + $0x4c] sm:$0xf] %v857
        %922 = vst [vmem:[%s180 + $0x50] sm:$0xf] %v858
        %923 = vst [vmem:[%s180 + $0x54] sm:$0xf] %v859
        %924 = vst [vmem:[%s180 + $0x58] sm:$0xf] %v860
        %925 = vst [vmem:[%s180 + $0x5c] sm:$0xf] %v861
        %926 = vst [vmem:[%s180 + $0x60] sm:$0xf] %v862
        %927 = vst [vmem:[%s180 + $0x64] sm:$0xf] %v863
        %928 = vst [vmem:[%s180 + $0x68] sm:$0xf] %v864
        %929 = vst [vmem:[%s180 + $0x6c] sm:$0xf] %v865
        %930 = vst [vmem:[%s180 + $0x70] sm:$0xf] %v866
        %931 = vst [vmem:[%s180 + $0x74] sm:$0xf] %v867
        %932 = vst [vmem:[%s180 + $0x78] sm:$0xf] %v868
        %933 = vst [vmem:[%s180 + $0x7c] sm:$0xf] %v869
        %s934 = sand.u32 %s98, 1
        %s935 = scalar_lea.sflag [#allocation3], %s934
        %s936 = sand.u32 %s98, 1
        %s937 = smul.addr %s936, 128
        %s938 = scalar_lea.vmem [#allocation2], %s937
        // Predicated region
        $region33: #{tpu_custom_call.1} parent=31 // pred_check
          %p939 = pneg %p108
        $region34: #{tpu_custom_call.1} parent=31 // pred_check_branch
          %941 = sbr.rel (%p939) target = $region36
        $region35: #{tpu_custom_call.1} parent=31 // pred_region
          %s942 = smul.u32 32, %s17
          %s944 = ssub.s32 2048, 2048
          %945 = vsyncadd %s935, %s944
          %s946 = smul.addr %s942, 64
          %s947 = scalar_lea.hbm %s3, %s946
          %s948 = sshll.u32 %s938, 4
          %s949 = int_to_ptr.vmem [resolvable:$true] %s948
          %954 = dma.vmem_to_hbm [thread:$0]  %s949, 2048, %s947, %s935, 64, 64, 4
        $region36: #{tpu_custom_call.1} parent=31 // pred_fallthru
          _
      $region32: #{tpu_custom_call.1} parent=5 // pred_fallthru
        _
      %p955 = scmp.le.s32.totalorder 2, %s12
      // Predicated region
      $region37: #{tpu_custom_call.1} parent=5 // pred_check
        %p956 = pneg %p955
      $region38: #{tpu_custom_call.1} parent=5 // pred_check_branch
        %958 = sbr.rel (%p956) target = $region40
      $region39: #{tpu_custom_call.1} parent=5 // pred_region
        %s959 = ssub.s32 %s12, 2
        // Predicated region
        $region41: #{tpu_custom_call.1} parent=39 // pred_check
          %p960 = pneg %p114
        $region42: #{tpu_custom_call.1} parent=39 // pred_check_branch
          %962 = sbr.rel (%p960) target = $region44
        $region43: #{tpu_custom_call.1} parent=39 // pred_region
          %s963 = sand.u32 %s99, 1
          %s964 = scalar_lea.sflag [#allocation3], %s963
          %s965 = sand.u32 %s99, 1
          %s966 = smul.addr %s965, 128
          %s967 = scalar_lea.vmem [#allocation2], %s966
          %968 = dma.done %s964, 2048
        $region44: #{tpu_custom_call.1} parent=39 // pred_fallthru
          _
      $region40: #{tpu_custom_call.1} parent=5 // pred_fallthru
        _
    $region6: #{tpu_custom_call.1} parent=1 // loop_footer
      %s16 = sadd.s32 1, %s12
    $region7: #{tpu_custom_call.1} parent=1 // loop_footer_branch
      %11 = sbr.rel target = $region3
    $region8: #{tpu_custom_call.1} parent=1 // loop_exit
      _
    %969 = vsyncpa [#allocation3], 1
    %s970 = scalar_lea.sflag [#allocation3], 1
    %971 = vsyncpa %s970, 1

</llo_original>
